<compile_context>
chip_gen: v7x
topology: tpu7x:2x2x1
jax: 0.10.0
libtpu: 0.0.40
codegen_flags: <defaults>
</compile_context>

<pallas_src>
import math

import jax
import jax.numpy as jnp
from jax.experimental import pallas as pl
from jax.experimental.pallas import tpu as pltpu

_LANE = 128
_SUBLANE = 8
_MAX_COLS = 4096                   # widest lane-dense last dim we look for
_BLOCK_BYTES = 2 * 1024 * 1024     # ~2 MiB per block (x4 double-buffered in+out = 8 MiB)
_VMEM_LIMIT = 32 * 1024 * 1024     # safe on v5e/v6e (128 MiB) and v7x (64 MiB physical)


# ----------------------------------------------------------------------------
# layout helpers
# ----------------------------------------------------------------------------
def _sublane_base(dtype):
    """Dtype-aware sublane granularity: 8 (32-bit), 16 (16-bit), 32 (8-bit)."""
    bits = jnp.dtype(dtype).itemsize * 8
    return max(_SUBLANE, (32 // bits) * _SUBLANE)


def _find_cols_nopad(n, sub):
    """Widest multiple of 128 (<= _MAX_COLS) dividing n with rows a multiple of `sub`."""
    c = min(_MAX_COLS, (n // _LANE) * _LANE)
    while c >= _LANE:
        if n % c == 0 and (n // c) % sub == 0:
            return c
        c -= _LANE
    return None


def _pad_cols(n, sub):
    """Column width used when padding is required (lane-dense, roughly n/sub wide)."""
    return max(_LANE, min(_MAX_COLS, ((n // sub) // _LANE) * _LANE))


# ----------------------------------------------------------------------------
# backward kernel: grad_input = -coeff * grad_output
# ----------------------------------------------------------------------------
def _neg_scale_kernel(coeff_ref, g_ref, o_ref):
    # coeff lives in SMEM (scalar prefetch); pre-cast the scalar to the tile dtype so
    # bf16/int8 tiles are never up-converted to f32 in vregs.
    o_ref[...] = g_ref[...] * (-coeff_ref[0]).astype(g_ref.dtype)


def _grl_backward_2d(g2d, coeff):
    r, c = g2d.shape
    dtype = g2d.dtype
    itemsize = jnp.dtype(dtype).itemsize
    sub = _sublane_base(dtype)

    # Full-width stripe blocks: contiguous HBM DMA per step, unmasked lane-dense stores.
    tc = c
    if r % sub:
        tr = r  # defensive: full-extent rows is always a legal block
    else:
        cap = max(sub, (_BLOCK_BYTES // (tc * itemsize)) // sub * sub)
        tr = max(sub, (min(r, cap) // sub) * sub)
        while r % tr:
            tr -= sub
        # Give v7x's two TensorCores >= 2 row blocks when the array allows it.
        if r // tr < 2 and r >= 2 * sub:
            half = ((r // 2) // sub) * sub
            while half >= sub and r % half:
                half -= sub
            if half >= sub:
                tr = half

    grid = (r // tr, c // tc)
    coeff_arr = jnp.reshape(coeff, (1,)).astype(jnp.float32)

    return pl.pallas_call(
        _neg_scale_kernel,
        out_shape=jax.ShapeDtypeStruct((r, c), dtype),
        grid_spec=pltpu.PrefetchScalarGridSpec(
            num_scalar_prefetch=1,
            grid=grid,
            in_specs=[pl.BlockSpec((tr, tc), lambda i, j, c_ref: (i, j))],
            out_specs=pl.BlockSpec((tr, tc), lambda i, j, c_ref: (i, j)),
        ),
        input_output_aliases={1: 0},   # donate the incoming grad buffer (arg 1 = g2d)
        compiler_params=pltpu.CompilerParams(
            dimension_semantics=("parallel", "parallel"),
            vmem_limit_bytes=_VMEM_LIMIT,
        ),
    )(coeff_arr, g2d)


def _grl_backward(g, coeff):
    n = g.size
    if n == 0:
        return g
    dtype = g.dtype
    sub = _sublane_base(dtype)
    flat = g.reshape(n)

    cols = _find_cols_nopad(n, sub)
    if cols is not None:
        g2d = flat.reshape(n // cols, cols)
        pad = 0
    else:
        # Awkward size: pad to a (sub, 128)-aligned 2D view (bounded blocks, unmasked stores).
        cols = _pad_cols(n, sub)
        chunk = sub * cols
        n_pad = pl.cdiv(n, chunk) * chunk
        pad = n_pad - n
        g2d = jnp.pad(flat, (0, pad)).reshape(n_pad // cols, cols)

    out = _grl_backward_2d(g2d, coeff).reshape(-1)
    if pad:
        out = out[:n]
    return out.reshape(g.shape)


# ----------------------------------------------------------------------------
# gradient-reverse op (custom VJP mirrors torch.autograd.Function)
# ----------------------------------------------------------------------------
@jax.custom_vjp
def gradient_reverse(x, coeff):
    # GradientReverseFunction.forward: output = input * 1.0 -> exact identity, no kernel.
    del coeff
    return x


def _gr_fwd(x, coeff):
    return x, coeff


def _gr_bwd(coeff, g):
    dx = _grl_backward(g, coeff)
    return dx, jnp.zeros_like(coeff)   # coeff gets no gradient (None in PyTorch)


gradient_reverse.defvjp(_gr_fwd, _gr_bwd)


# ----------------------------------------------------------------------------
# module wrapper (host-side warm-start schedule, like the nn.Module)
# ----------------------------------------------------------------------------
class WarmStartGradientReverseLayer:
    def __init__(self, alpha=1.0, lo=0.0, hi=1.0, max_iters=1000.0, auto_step=False):
        self.alpha = alpha
        self.lo = lo
        self.hi = hi
        self.iter_num = 0
        self.max_iters = max_iters
        self.auto_step = auto_step

    def _coeff(self):
        return float(
            2.0 * (self.hi - self.lo)
            / (1.0 + math.exp(-self.alpha * self.iter_num / self.max_iters))
            - (self.hi - self.lo) + self.lo)

    def __call__(self, x):
        coeff = jnp.asarray(self._coeff(), dtype=jnp.float32)
        if self.auto_step:
            self.step()
        return gradient_reverse(x, coeff)

    def step(self):
        self.iter_num += 1


# ----------------------------------------------------------------------------
# demo / checks
# ----------------------------------------------------------------------------
if __name__ == "__main__":
    key = jax.random.PRNGKey(0)
    k1, k2, k3, k4 = jax.random.split(key, 4)

    # small input consistent with the module (it accepts any feature tensor)
    x = jax.random.normal(k1, (2, 4, 16, 16), jnp.float32)

    layer = WarmStartGradientReverseLayer(alpha=1.0, lo=0.0, hi=1.0,
                                          max_iters=1000.0, auto_step=True)
    y = jax.block_until_ready(layer(x))
    assert y.shape == x.shape
    assert jnp.allclose(y, x), "forward must be identity"
    assert layer.iter_num == 1  # auto_step advanced the schedule

    # gradient-reversal check (exercises the Pallas backward kernel): dL/dx = -coeff
    layer2 = WarmStartGradientReverseLayer(alpha=1.0, lo=0.0, hi=1.0,
                                           max_iters=1000.0, auto_step=False)
    layer2.iter_num = 500
    coeff = layer2._coeff()
    g = jax.block_until_ready(jax.grad(lambda t: jnp.sum(layer2(t)))(x))
    assert jnp.allclose(g, -coeff * jnp.ones_like(x), atol=1e-5, rtol=1e-5)

    # larger input: lane-dense (128, 4096) view, multi-block grid along rows
    x_big = jax.random.normal(k2, (1024, 512), jnp.float32)
    y_big = jax.block_until_ready(layer2(x_big))
    assert jnp.allclose(y_big, x_big)
    g_big = jax.block_until_ready(jax.grad(lambda t: jnp.sum(layer2(t)))(x_big))
    assert jnp.allclose(g_big, -coeff * jnp.ones_like(x_big), atol=1e-5, rtol=1e-5)

    # awkward (non-128) size exercises the bounded pad-and-slice path
    x_odd = jax.random.normal(k3, (3, 5, 7), jnp.float32)
    g_odd = jax.block_until_ready(jax.grad(lambda t: jnp.sum(layer2(t)))(x_odd))
    assert jnp.allclose(g_odd, -coeff * jnp.ones_like(x_odd), atol=1e-5, rtol=1e-5)

    # bf16 activations exercise the dtype-aware sublane base + scalar pre-cast
    x_bf16 = jax.random.normal(k4, (64, 384), jnp.bfloat16)
    g_bf16 = jax.block_until_ready(
        jax.grad(lambda t: jnp.sum(layer2(t).astype(jnp.float32)))(x_bf16))
    assert jnp.allclose(g_bf16.astype(jnp.float32),
                        -coeff * jnp.ones((64, 384), jnp.float32), atol=1e-2, rtol=1e-2)

    print("KERNEL_OK")
</pallas_src>

<mosaic_0001>
module attributes {stable_mosaic.version = 11 : i64} {
  func.func @_neg_scale_kernel(%arg0: i32, %arg1: i32, %arg2: memref<1xf32, #tpu.memory_space<smem>>, %arg3: memref<8x256xf32, #tpu.memory_space<vmem>>, %arg4: memref<8x256xf32, #tpu.memory_space<vmem>>) attributes {dimension_semantics = [#tpu.dimension_semantics<parallel>, #tpu.dimension_semantics<parallel>], iteration_bounds = array<i64: 1, 1>, scalar_prefetch = 1 : i64, scratch_operands = 0 : i64, tpu.core_type = #tpu.core_type<tc>, window_params = [{transform_indices = @transform_0, window_bounds = array<i64: 8, 256>}, {transform_indices = @transform_1, window_bounds = array<i64: 8, 256>}]} {
    %c0 = arith.constant 0 : index
    %c0_0 = arith.constant 0 : index
    %0 = vector.load %arg3[%c0, %c0_0] : memref<8x256xf32, #tpu.memory_space<vmem>>, vector<8x256xf32>
    %c0_1 = arith.constant 0 : index
    %1 = memref.load %arg2[%c0_1] : memref<1xf32, #tpu.memory_space<smem>>
    %cst = arith.constant 0.000000e+00 : f32
    %2 = arith.subf %cst, %1 : f32
    %3 = vector.broadcast %2 : f32 to vector<8x256xf32>
    %4 = arith.mulf %0, %3 : vector<8x256xf32>
    %c0_2 = arith.constant 0 : index
    %c0_3 = arith.constant 0 : index
    %5 = vector.load %arg4[%c0_2, %c0_3] : memref<8x256xf32, #tpu.memory_space<vmem>>, vector<8x256xf32>
    tpu.vector_store %arg4[%c0_2, %c0_3], %4 {strides = array<i32>} : memref<8x256xf32, #tpu.memory_space<vmem>>, vector<8x256xf32>,
    return
  }
  func.func @transform_0(%arg0: i32, %arg1: i32, %arg2: memref<1xf32, #tpu.memory_space<smem>>) -> (i32, i32) {
    %c0_i32 = arith.constant 0 : i32
    return %arg0, %arg1 : i32, i32
  }
  func.func @transform_1(%arg0: i32, %arg1: i32, %arg2: memref<1xf32, #tpu.memory_space<smem>>) -> (i32, i32) {
    %c0_i32 = arith.constant 0 : i32
    return %arg0, %arg1 : i32, i32
  }
}

</mosaic_0001>

<llo_original>
// kernel: tpu_custom_call.1
$region0: #{tpu_custom_call.1}
  #allocation0 [shape = 'u32[]', space=smem, size = 0x4, offset = 0x4, fixed_abs, tag = 'smem constant byte address 0x4 - core index']
  #allocation1 [shape = 'u32[144,128]{1,0:T(1,128)}', space=vmem, size = 0x12000, scoped, tag = 'internal scratch']
  #allocation2 [shape = 's32[1]{0}', space=sflag, size = 0x4, scoped, tag = 'scoped memory for tpu_custom_call.1']
  #allocation3 [shape = 'f32[1]{0:T(128)S(6)}', space=smem, size = 0x200, scoped, tag = 'prefetched SMEM operand 0']
  %s0 = inlined_call_operand.<no memory space> [shape: f32[1], index: 0, kind: input, shape index: {}]
  %s1 = inlined_call_operand.hbm [shape: f32[8,256], index: 1, kind: input, shape index: {}, may-alias: {1,2}]
  %s2 = inlined_call_operand.hbm [shape: f32[8,256], index: 2, kind: output, shape index: {}, may-alias: {1,2}]
  %s3 = sld [smem:[#allocation0]]
  $region18: #{tpu_custom_call.1} parent=0
    _
  %s5 = ssub.s32 1, %s3
  %s6 = scalar_select 0, %s5, %s3
  %7 = sst [smem:[#allocation3]] %s0
  $region1: #{tpu_custom_call.1} parent=0
    #allocation4 [shape = 'u8[8192]{0}', space=vmem, size = 0x2000, scoped, tag = 'input window, operand 1, single buffered']
    #allocation5 [shape = 's32[1]{0}', space=sflag, size = 0x4, scoped, tag = 'scoped memory for tpu_custom_call.1']
    #allocation6 [shape = 's32[1]{0}', space=sflag, size = 0x4, scoped, tag = 'scoped memory for tpu_custom_call.1']
    #allocation7 [shape = 'u8[8192]{0}', space=vmem, size = 0x2000, scoped, tag = 'output window, operand 0, single buffered']
    %8 = vsyncpa [#allocation5], 0
    %9 = vsyncpa [#allocation6], 0
    // Predicated region
    $region2: #{tpu_custom_call.1} parent=1 // pred_check
      _
    $region3: #{tpu_custom_call.1} parent=1 // pred_check_branch
      %11 = sbr.rel (0) target = $region5
    $region4: #{tpu_custom_call.1} parent=1 // pred_region
      %s13 = ssub.s32 256, 256
      %14 = vsyncadd [#allocation5], %s13
      %s16 = sshll.u32 [#allocation4], 4
      %s17 = int_to_ptr.vmem [resolvable:$true] %s16
      %19 = dma.hbm_to_vmem [thread:$0]  %s1, 256, %s17, [#allocation5]
    $region5: #{tpu_custom_call.1} parent=1 // pred_fallthru
      _
    // Predicated region
    $region6: #{tpu_custom_call.1} parent=1 // pred_check
      _
    $region7: #{tpu_custom_call.1} parent=1 // pred_check_branch
      %21 = sbr.rel (0) target = $region9
    $region8: #{tpu_custom_call.1} parent=1 // pred_region
      %22 = dma.done [#allocation5], 256
    $region9: #{tpu_custom_call.1} parent=1 // pred_fallthru
      _
    %v23 = vld [vmem:[#allocation4] sm:$0xff]
    %v24 = vld [vmem:[#allocation4 + $0x8] sm:$0xff]
    %s25 = sld [smem:[#allocation3]]
    %s26 = ssub.f32 0.0, %s25
    %v27 = vstv %s26
    %v28 = vmul.f32 %v23, %v27
    %v29 = vmul.f32 %v24, %v27
    %30 = vst [vmem:[#allocation7] sm:$0xff] %v28
    %31 = vst [vmem:[#allocation7 + $0x8] sm:$0xff] %v29
    // Predicated region
    $region10: #{tpu_custom_call.1} parent=1 // pred_check
      _
    $region11: #{tpu_custom_call.1} parent=1 // pred_check_branch
      %33 = sbr.rel (0) target = $region13
    $region12: #{tpu_custom_call.1} parent=1 // pred_region
      %s35 = ssub.s32 256, 256
      %36 = vsyncadd [#allocation6], %s35
      %s38 = sshll.u32 [#allocation7], 4
      %s39 = int_to_ptr.vmem [resolvable:$true] %s38
      %41 = dma.vmem_to_hbm [thread:$0]  %s39, 256, %s2, [#allocation6]
    $region13: #{tpu_custom_call.1} parent=1 // pred_fallthru
      _
    // Predicated region
    $region14: #{tpu_custom_call.1} parent=1 // pred_check
      _
    $region15: #{tpu_custom_call.1} parent=1 // pred_check_branch
      %43 = sbr.rel (0) target = $region17
    $region16: #{tpu_custom_call.1} parent=1 // pred_region
      %44 = dma.done [#allocation6], 256
    $region17: #{tpu_custom_call.1} parent=1 // pred_fallthru
      _
    %45 = vsyncpa [#allocation5], 1
    %46 = vsyncpa [#allocation6], 1

</llo_original>
